<compile_context>
chip_gen: v7x
topology: tpu7x:2x2x1
jax: 0.10.0
libtpu: 0.0.40
codegen_flags: <defaults>
</compile_context>

<pallas_src>
import jax
import jax.numpy as jnp
from jax import lax
from jax.experimental import pallas as pl
from jax.experimental.pallas import tpu as pltpu


def _erf(x, *, in_kernel):
    # Abramowitz & Stegun 7.1.26 polynomial (|err| < 1.5e-7).  Used instead of
    # lax.erf so the kernel only needs exp / mul / add / where lowerings.
    a1, a2, a3, a4, a5 = (0.254829592, -0.284496736, 1.421413741,
                          -1.453152027, 1.061405429)
    p = 0.3275911
    s = jnp.where(x >= 0.0, 1.0, -1.0)
    ax = jnp.abs(x)
    denom = 1.0 + p * ax
    if in_kernel:
        # EUP reciprocal: frees VALU bundles (kernel is VPU-bound here);
        # slightly approximate vs. an exact divide.
        t = pl.reciprocal(denom, approx=True)
    else:
        t = 1.0 / denom
    poly = ((((a5 * t + a4) * t + a3) * t + a2) * t + a1) * t
    return s * (1.0 - poly * jnp.exp(-ax * ax))


def _gelu_exact(x, *, in_kernel):
    # PyTorch nn.GELU() default (approximate='none'): 0.5*x*(1+erf(x/sqrt(2)))
    return 0.5 * x * (1.0 + _erf(x * 0.7071067811865476, in_kernel=in_kernel))


def vit_kernel(x_ref, wpw_ref, bpw_ref, pos_ref, gamma_ref, beta_ref,
               whead_ref, bhead_ref, o_ref):
    x = x_ref[0]                                            # (C, N)

    # 1+2) fused depthwise+pointwise 1x1 conv, channels-first: (D,C) @ (C,N)
    z = jnp.dot(wpw_ref[...], x,
                preferred_element_type=jnp.float32) + bpw_ref[...]   # (D, N)

    # 3) exact GELU
    z = _gelu_exact(z, in_kernel=True)

    # 4) positional bias (broadcast over batch via the grid)
    z = z + pos_ref[...]

    # 5) dropout(p=0.0) -> identity
    # 6) TODO(synk): TransformerBlock's definition is not part of the provided
    #    source (fct_segmentation.py excerpt); the transformer stack is
    #    treated as identity here.

    # 7) LayerNorm over normalized_shape=(D, H, W) == whole (D, N) slab,
    #    one-pass statistics.
    mu = jnp.mean(z)
    var = jnp.maximum(jnp.mean(z * z) - mu * mu, 0.0)
    zn = (z - mu) * lax.rsqrt(var + 1e-5)
    zn = zn * gamma_ref[...] + beta_ref[...]

    # 8) segmentation 1x1 conv D -> num_classes: (K,D) @ (D,N)
    out = jnp.dot(whead_ref[...], zn,
                  preferred_element_type=jnp.float32) + bhead_ref[...]  # (K, N)
    o_ref[0] = out.astype(o_ref.dtype)


def vision_transformer_forward(x_nchw, params):
    """x_nchw: (B, C, H, W) float32 -> (B, num_classes, H, W) float32."""
    B, C, H, W = x_nchw.shape
    N = H * W
    D, _ = params["w_pw"].shape
    K, _ = params["w_head"].shape

    # NCHW -> (B, C, N): pure reshape, no transpose / HBM round-trip.
    x_cn = x_nchw.reshape(B, C, N)

    # Fold depthwise 1x1 conv (per-channel scale s, bias t) into the pointwise
    # conv at trace time (exact — both linear over channels):
    #   W' = W_pw * s[None, :]          b' = W_pw @ t + b_pw
    w_pw_f = params["w_pw"] * params["w_dw"][None, :]                      # (D, C)
    b_pw_f = (params["w_pw"] @ params["b_dw"] + params["b_pw"])[:, None]   # (D, 1)
    b_head = params["b_head"][:, None]                                     # (K, 1)

    weights = (w_pw_f, b_pw_f, params["pos"], params["gamma"],
               params["beta"], params["w_head"], b_head)

    def full_spec(arr):
        nd = arr.ndim
        return pl.BlockSpec(arr.shape, lambda b, _nd=nd: (0,) * _nd)

    out_cn = pl.pallas_call(
        vit_kernel,
        out_shape=jax.ShapeDtypeStruct((B, K, N), jnp.float32),
        grid=(B,),
        in_specs=[pl.BlockSpec((1, C, N), lambda b: (b, 0, 0))]
                 + [full_spec(w) for w in weights],
        out_specs=pl.BlockSpec((1, K, N), lambda b: (b, 0, 0)),
        compiler_params=pltpu.CompilerParams(
            dimension_semantics=("parallel",)),
    )(x_cn, *weights)

    # (B, K, N) -> (B, K, H, W): pure reshape (already NCHW-ordered).
    return out_cn.reshape(B, K, H, W)


def make_params(key, *, num_channels, embed_dim, num_classes, H, W):
    """Deterministic synthetic parameters (shapes mirror the torch module)."""
    N = H * W
    ks = jax.random.split(key, 9)
    # depthwise Conv2d(C, C, 1, groups=C): weight (C,1,1,1) -> (C,), bias (C,)
    w_dw = 0.5 * jax.random.normal(ks[0], (num_channels,), jnp.float32)
    b_dw = 0.1 * jax.random.normal(ks[1], (num_channels,), jnp.float32)
    # pointwise Conv2d(C, D, 1): weight (D,C,1,1) -> (D, C), bias (D,)
    w_pw = jax.random.normal(ks[2], (embed_dim, num_channels),
                             jnp.float32) / jnp.sqrt(float(num_channels))
    b_pw = 0.1 * jax.random.normal(ks[3], (embed_dim,), jnp.float32)
    # positional_bias: torch.randn(D, H, W) -> stored flattened as (D, N)
    pos = jax.random.normal(ks[4], (embed_dim, N), jnp.float32)
    # LayerNorm((D, H, W)) affine, stored as (D, N)
    gamma = 1.0 + 0.1 * jax.random.normal(ks[5], (embed_dim, N), jnp.float32)
    beta = 0.1 * jax.random.normal(ks[6], (embed_dim, N), jnp.float32)
    # head Conv2d(D, num_classes, k=1): weight (K,D,1,1) -> (K, D), bias (K,)
    w_head = jax.random.normal(ks[7], (num_classes, embed_dim),
                               jnp.float32) / jnp.sqrt(float(embed_dim))
    b_head = 0.1 * jax.random.normal(ks[8], (num_classes,), jnp.float32)
    return dict(w_dw=w_dw, b_dw=b_dw, w_pw=w_pw, b_pw=b_pw, pos=pos,
                gamma=gamma, beta=beta, w_head=w_head, b_head=b_head)


def reference_forward(x_nchw, params):
    """Pure-JAX reference (un-fused, exact divide), for a correctness check."""
    B, C, H, W = x_nchw.shape
    N = H * W
    x = x_nchw.reshape(B, C, N)
    y = x * params["w_dw"][None, :, None] + params["b_dw"][None, :, None]
    z = (jnp.einsum("dc,bcn->bdn", params["w_pw"], y)
         + params["b_pw"][None, :, None])
    z = _gelu_exact(z, in_kernel=False)
    z = z + params["pos"][None]
    mu = jnp.mean(z, axis=(1, 2), keepdims=True)
    var = jnp.mean((z - mu) ** 2, axis=(1, 2), keepdims=True)
    zn = (z - mu) / jnp.sqrt(var + 1e-5)
    zn = zn * params["gamma"][None] + params["beta"][None]
    out = (jnp.einsum("kd,bdn->bkn", params["w_head"], zn)
           + params["b_head"][None, :, None])
    K = params["w_head"].shape[0]
    return out.reshape(B, K, H, W)


if __name__ == "__main__":
    # Small config consistent with the module's forward:
    #   B=2, num_channels=4, input_resolution=(16,16), embed_dim=32,
    #   num_classes=8, patch_width=1, transformer_kernel_size=1, dropout=0.0
    B, C, H, W = 2, 4, 16, 16
    embed_dim, num_classes = 32, 8

    key = jax.random.PRNGKey(0)
    k_x, k_p = jax.random.split(key)
    x = jax.random.normal(k_x, (B, C, H, W), jnp.float32)
    params = make_params(k_p, num_channels=C, embed_dim=embed_dim,
                         num_classes=num_classes, H=H, W=W)

    out = vision_transformer_forward(x, params)
    out = jax.block_until_ready(out)

    ref = reference_forward(x, params)
    assert out.shape == (B, num_classes, H, W), out.shape
    # Tolerance is loose only because the kernel's GELU uses the EUP
    # approximate reciprocal (pl.reciprocal(approx=True)) while the pure-JAX
    # reference uses an exact divide; structural/layout bugs produce O(1)
    # errors and would still trip this check.
    assert jnp.allclose(out, ref, atol=1e-2, rtol=1e-2), (
        float(jnp.max(jnp.abs(out - ref))))
    print("KERNEL_OK")
</pallas_src>

<mosaic_0001>
module attributes {stable_mosaic.version = 11 : i64} {
  func.func @vit_kernel(%arg0: i32, %arg1: memref<1x4x256xf32, #tpu.memory_space<vmem>>, %arg2: memref<32x4xf32, #tpu.memory_space<vmem>>, %arg3: memref<32x1xf32, #tpu.memory_space<vmem>>, %arg4: memref<32x256xf32, #tpu.memory_space<vmem>>, %arg5: memref<32x256xf32, #tpu.memory_space<vmem>>, %arg6: memref<32x256xf32, #tpu.memory_space<vmem>>, %arg7: memref<8x32xf32, #tpu.memory_space<vmem>>, %arg8: memref<8x1xf32, #tpu.memory_space<vmem>>, %arg9: memref<1x8x256xf32, #tpu.memory_space<vmem>>) attributes {dimension_semantics = [#tpu.dimension_semantics<parallel>], iteration_bounds = array<i64: 2>, scalar_prefetch = 0 : i64, scratch_operands = 0 : i64, tpu.core_type = #tpu.core_type<tc>, window_params = [{transform_indices = @transform_0, window_bounds = array<i64: 1, 4, 256>}, {pipeline_mode = #tpu.pipeline_mode<synchronous>, transform_indices = @transform_1, window_bounds = array<i64: 32, 4>}, {pipeline_mode = #tpu.pipeline_mode<synchronous>, transform_indices = @transform_2, window_bounds = array<i64: 32, 1>}, {pipeline_mode = #tpu.pipeline_mode<synchronous>, transform_indices = @transform_3, window_bounds = array<i64: 32, 256>}, {pipeline_mode = #tpu.pipeline_mode<synchronous>, transform_indices = @transform_4, window_bounds = array<i64: 32, 256>}, {pipeline_mode = #tpu.pipeline_mode<synchronous>, transform_indices = @transform_5, window_bounds = array<i64: 32, 256>}, {pipeline_mode = #tpu.pipeline_mode<synchronous>, transform_indices = @transform_6, window_bounds = array<i64: 8, 32>}, {pipeline_mode = #tpu.pipeline_mode<synchronous>, transform_indices = @transform_7, window_bounds = array<i64: 8, 1>}, {transform_indices = @transform_8, window_bounds = array<i64: 1, 8, 256>}]} {
    %c0 = arith.constant 0 : index
    %c0_0 = arith.constant 0 : index
    %c0_1 = arith.constant 0 : index
    %0 = vector.load %arg1[%c0, %c0_0, %c0_1] : memref<1x4x256xf32, #tpu.memory_space<vmem>>, vector<1x4x256xf32>
    %1 = vector.shape_cast %0 : vector<1x4x256xf32> to vector<4x256xf32>
    %c0_2 = arith.constant 0 : index
    %c0_3 = arith.constant 0 : index
    %2 = vector.load %arg2[%c0_2, %c0_3] : memref<32x4xf32, #tpu.memory_space<vmem>>, vector<32x4xf32>
    %cst = arith.constant dense<0.000000e+00> : vector<32x256xf32>
    %3 = tpu.matmul %2, %1, %cst {dimension_numbers = #tpu.dot_dimension_numbers<[1], [0], [0], [1], [0, 0, 1, 1], [], []>} : vector<32x4xf32>, vector<4x256xf32>, vector<32x256xf32> -> vector<32x256xf32>
    %c0_4 = arith.constant 0 : index
    %c0_5 = arith.constant 0 : index
    %4 = vector.load %arg3[%c0_4, %c0_5] : memref<32x1xf32, #tpu.memory_space<vmem>>, vector<32x1xf32>
    %5 = vector.broadcast %4 : vector<32x1xf32> to vector<32x256xf32>
    %6 = arith.addf %3, %5 : vector<32x256xf32>
    %cst_6 = arith.constant 5.000000e-01 : f32
    %7 = vector.broadcast %cst_6 : f32 to vector<32x256xf32>
    %8 = arith.mulf %7, %6 : vector<32x256xf32>
    %cst_7 = arith.constant 0.707106769 : f32
    %9 = vector.broadcast %cst_7 : f32 to vector<32x256xf32>
    %10 = arith.mulf %6, %9 : vector<32x256xf32>
    %cst_8 = arith.constant 0.000000e+00 : f32
    %11 = vector.broadcast %cst_8 : f32 to vector<32x256xf32>
    %12 = arith.cmpf oge, %10, %11 : vector<32x256xf32>
    %cst_9 = arith.constant 1.000000e+00 : f32
    %cst_10 = arith.constant -1.000000e+00 : f32
    %13 = vector.broadcast %cst_9 : f32 to vector<32x256xf32>
    %14 = vector.broadcast %cst_10 : f32 to vector<32x256xf32>
    %15 = arith.select %12, %13, %14 : vector<32x256xi1>, vector<32x256xf32>
    %16 = math.absf %10 : vector<32x256xf32>
    %cst_11 = arith.constant 0.327591091 : f32
    %17 = vector.broadcast %cst_11 : f32 to vector<32x256xf32>
    %18 = arith.mulf %17, %16 : vector<32x256xf32>
    %cst_12 = arith.constant 1.000000e+00 : f32
    %19 = vector.broadcast %cst_12 : f32 to vector<32x256xf32>
    %20 = arith.addf %19, %18 : vector<32x256xf32>
    %21 = tpu.reciprocal %20 {approx = true} : vector<32x256xf32> -> vector<32x256xf32>
    %cst_13 = arith.constant 1.06140542 : f32
    %22 = vector.broadcast %cst_13 : f32 to vector<32x256xf32>
    %23 = arith.mulf %22, %21 : vector<32x256xf32>
    %cst_14 = arith.constant -1.45315206 : f32
    %24 = vector.broadcast %cst_14 : f32 to vector<32x256xf32>
    %25 = arith.addf %23, %24 : vector<32x256xf32>
    %26 = arith.mulf %25, %21 : vector<32x256xf32>
    %cst_15 = arith.constant 1.42141378 : f32
    %27 = vector.broadcast %cst_15 : f32 to vector<32x256xf32>
    %28 = arith.addf %26, %27 : vector<32x256xf32>
    %29 = arith.mulf %28, %21 : vector<32x256xf32>
    %cst_16 = arith.constant -0.284496725 : f32
    %30 = vector.broadcast %cst_16 : f32 to vector<32x256xf32>
    %31 = arith.addf %29, %30 : vector<32x256xf32>
    %32 = arith.mulf %31, %21 : vector<32x256xf32>
    %cst_17 = arith.constant 0.254829586 : f32
    %33 = vector.broadcast %cst_17 : f32 to vector<32x256xf32>
    %34 = arith.addf %32, %33 : vector<32x256xf32>
    %35 = arith.mulf %34, %21 : vector<32x256xf32>
    %cst_18 = arith.constant 0.000000e+00 : f32
    %36 = vector.broadcast %cst_18 : f32 to vector<32x256xf32>
    %37 = arith.subf %36, %16 : vector<32x256xf32>
    %38 = arith.mulf %37, %16 : vector<32x256xf32>
    %39 = math.exp %38 : vector<32x256xf32>
    %40 = arith.mulf %35, %39 : vector<32x256xf32>
    %cst_19 = arith.constant 1.000000e+00 : f32
    %41 = vector.broadcast %cst_19 : f32 to vector<32x256xf32>
    %42 = arith.subf %41, %40 : vector<32x256xf32>
    %43 = arith.mulf %15, %42 : vector<32x256xf32>
    %cst_20 = arith.constant 1.000000e+00 : f32
    %44 = vector.broadcast %cst_20 : f32 to vector<32x256xf32>
    %45 = arith.addf %44, %43 : vector<32x256xf32>
    %46 = arith.mulf %8, %45 : vector<32x256xf32>
    %c0_21 = arith.constant 0 : index
    %c0_22 = arith.constant 0 : index
    %47 = vector.load %arg4[%c0_21, %c0_22] : memref<32x256xf32, #tpu.memory_space<vmem>>, vector<32x256xf32>
    %48 = arith.addf %46, %47 : vector<32x256xf32>
    %49 = vector.shape_cast %48 : vector<32x256xf32> to vector<1x32x256xf32>
    %cst_23 = arith.constant dense<0.000000e+00> : vector<1xf32>
    %50 = vector.multi_reduction <add>, %49, %cst_23 [1, 2] : vector<1x32x256xf32> to vector<1xf32>
    %51 = vector.shape_cast %50 : vector<1xf32> to vector<1x1x1xf32>
    %52 = vector.extract %51[0, 0, 0] : f32 from vector<1x1x1xf32>
    %cst_24 = arith.constant 8.192000e+03 : f32
    %53 = arith.divf %52, %cst_24 : f32
    %54 = arith.mulf %48, %48 : vector<32x256xf32>
    %55 = vector.shape_cast %54 : vector<32x256xf32> to vector<1x32x256xf32>
    %cst_25 = arith.constant dense<0.000000e+00> : vector<1xf32>
    %56 = vector.multi_reduction <add>, %55, %cst_25 [1, 2] : vector<1x32x256xf32> to vector<1xf32>
    %57 = vector.shape_cast %56 : vector<1xf32> to vector<1x1x1xf32>
    %58 = vector.extract %57[0, 0, 0] : f32 from vector<1x1x1xf32>
    %cst_26 = arith.constant 8.192000e+03 : f32
    %59 = arith.divf %58, %cst_26 : f32
    %60 = arith.mulf %53, %53 : f32
    %61 = arith.subf %59, %60 : f32
    %cst_27 = arith.constant 0.000000e+00 : f32
    %62 = arith.maximumf %61, %cst_27 : f32
    %63 = vector.broadcast %53 : f32 to vector<32x256xf32>
    %64 = arith.subf %48, %63 : vector<32x256xf32>
    %cst_28 = arith.constant 9.99999974E-6 : f32
    %65 = arith.addf %62, %cst_28 : f32
    %66 = math.rsqrt %65 : f32
    %67 = vector.broadcast %66 : f32 to vector<32x256xf32>
    %68 = arith.mulf %64, %67 : vector<32x256xf32>
    %c0_29 = arith.constant 0 : index
    %c0_30 = arith.constant 0 : index
    %69 = vector.load %arg5[%c0_29, %c0_30] : memref<32x256xf32, #tpu.memory_space<vmem>>, vector<32x256xf32>
    %70 = arith.mulf %68, %69 : vector<32x256xf32>
    %c0_31 = arith.constant 0 : index
    %c0_32 = arith.constant 0 : index
    %71 = vector.load %arg6[%c0_31, %c0_32] : memref<32x256xf32, #tpu.memory_space<vmem>>, vector<32x256xf32>
    %72 = arith.addf %70, %71 : vector<32x256xf32>
    %c0_33 = arith.constant 0 : index
    %c0_34 = arith.constant 0 : index
    %73 = vector.load %arg7[%c0_33, %c0_34] : memref<8x32xf32, #tpu.memory_space<vmem>>, vector<8x32xf32>
    %cst_35 = arith.constant dense<0.000000e+00> : vector<8x256xf32>
    %74 = tpu.matmul %73, %72, %cst_35 {dimension_numbers = #tpu.dot_dimension_numbers<[1], [0], [0], [1], [0, 0, 1, 1], [], []>} : vector<8x32xf32>, vector<32x256xf32>, vector<8x256xf32> -> vector<8x256xf32>
    %c0_36 = arith.constant 0 : index
    %c0_37 = arith.constant 0 : index
    %75 = vector.load %arg8[%c0_36, %c0_37] : memref<8x1xf32, #tpu.memory_space<vmem>>, vector<8x1xf32>
    %76 = vector.broadcast %75 : vector<8x1xf32> to vector<8x256xf32>
    %77 = arith.addf %74, %76 : vector<8x256xf32>
    %c0_38 = arith.constant 0 : index
    %c0_39 = arith.constant 0 : index
    %c0_40 = arith.constant 0 : index
    %78 = vector.load %arg9[%c0_38, %c0_39, %c0_40] : memref<1x8x256xf32, #tpu.memory_space<vmem>>, vector<1x8x256xf32>
    %79 = vector.shape_cast %78 : vector<1x8x256xf32> to vector<8x256xf32>
    %80 = vector.shape_cast %77 : vector<8x256xf32> to vector<1x8x256xf32>
    tpu.vector_store %arg9[%c0_38, %c0_39, %c0_40], %80 {strides = array<i32>} : memref<1x8x256xf32, #tpu.memory_space<vmem>>, vector<1x8x256xf32>,
    return
  }
  func.func @transform_0(%arg0: i32) -> (i32, i32, i32) {
    %c0_i32 = arith.constant 0 : i32
    %c0_i32_0 = arith.constant 0 : i32
    %c0_i32_1 = arith.constant 0 : i32
    return %arg0, %c0_i32, %c0_i32_0 : i32, i32, i32
  }
  func.func @transform_1(%arg0: i32) -> (i32, i32) {
    %c0_i32 = arith.constant 0 : i32
    %c0_i32_0 = arith.constant 0 : i32
    %c0_i32_1 = arith.constant 0 : i32
    return %c0_i32, %c0_i32_0 : i32, i32
  }
  func.func @transform_2(%arg0: i32) -> (i32, i32) {
    %c0_i32 = arith.constant 0 : i32
    %c0_i32_0 = arith.constant 0 : i32
    %c0_i32_1 = arith.constant 0 : i32
    return %c0_i32, %c0_i32_0 : i32, i32
  }
  func.func @transform_3(%arg0: i32) -> (i32, i32) {
    %c0_i32 = arith.constant 0 : i32
    %c0_i32_0 = arith.constant 0 : i32
    %c0_i32_1 = arith.constant 0 : i32
    return %c0_i32, %c0_i32_0 : i32, i32
  }
  func.func @transform_4(%arg0: i32) -> (i32, i32) {
    %c0_i32 = arith.constant 0 : i32
    %c0_i32_0 = arith.constant 0 : i32
    %c0_i32_1 = arith.constant 0 : i32
    return %c0_i32, %c0_i32_0 : i32, i32
  }
  func.func @transform_5(%arg0: i32) -> (i32, i32) {
    %c0_i32 = arith.constant 0 : i32
    %c0_i32_0 = arith.constant 0 : i32
    %c0_i32_1 = arith.constant 0 : i32
    return %c0_i32, %c0_i32_0 : i32, i32
  }
  func.func @transform_6(%arg0: i32) -> (i32, i32) {
    %c0_i32 = arith.constant 0 : i32
    %c0_i32_0 = arith.constant 0 : i32
    %c0_i32_1 = arith.constant 0 : i32
    return %c0_i32, %c0_i32_0 : i32, i32
  }
  func.func @transform_7(%arg0: i32) -> (i32, i32) {
    %c0_i32 = arith.constant 0 : i32
    %c0_i32_0 = arith.constant 0 : i32
    %c0_i32_1 = arith.constant 0 : i32
    return %c0_i32, %c0_i32_0 : i32, i32
  }
  func.func @transform_8(%arg0: i32) -> (i32, i32, i32) {
    %c0_i32 = arith.constant 0 : i32
    %c0_i32_0 = arith.constant 0 : i32
    %c0_i32_1 = arith.constant 0 : i32
    return %arg0, %c0_i32, %c0_i32_0 : i32, i32, i32
  }
}

</mosaic_0001>

<llo_original>
// kernel: tpu_custom_call.1
$region0: #{tpu_custom_call.1}
  #allocation0 [shape = 'u32[]', space=smem, size = 0x4, offset = 0x4, fixed_abs, tag = 'smem constant byte address 0x4 - core index']
  #allocation1 [shape = 'u32[144,128]{1,0:T(1,128)}', space=vmem, size = 0x12000, scoped, tag = 'internal scratch']
  %s0 = inlined_call_operand.vmem [shape: f32[2,4,256], index: 0, kind: input, shape index: {}]
  %s1 = inlined_call_operand.vmem [shape: f32[32,4], index: 1, kind: input, shape index: {}]
  %s2 = inlined_call_operand.vmem [shape: f32[32,1], index: 2, kind: input, shape index: {}]
  %s3 = inlined_call_operand.vmem [shape: f32[32,256], index: 3, kind: input, shape index: {}]
  %s4 = inlined_call_operand.hbm [shape: f32[32,256], index: 4, kind: input, shape index: {}]
  %s5 = inlined_call_operand.hbm [shape: f32[32,256], index: 5, kind: input, shape index: {}]
  %s6 = inlined_call_operand.vmem [shape: f32[8,32], index: 6, kind: input, shape index: {}]
  %s7 = inlined_call_operand.vmem [shape: f32[8,1], index: 7, kind: input, shape index: {}]
  %s8 = inlined_call_operand.hbm [shape: f32[2,8,256], index: 8, kind: output, shape index: {}]
  %s9 = sld [smem:[#allocation0]]
  $region73: #{tpu_custom_call.1} parent=0
    _
  %s11 = ssub.s32 1, %s9
  %s12 = scalar_select 0, %s11, %s9
  $region1: #{tpu_custom_call.1} parent=0
    #allocation2 [shape = 'u8[32768]{0}', space=vmem, size = 0x8000, scoped, tag = 'input window, operand 4, single buffered']
    #allocation3 [shape = 's32[2]{0}', space=sflag, size = 0x8, scoped, tag = 'scoped memory for tpu_custom_call.1']
    #allocation4 [shape = 's32[2]{0}', space=sflag, size = 0x8, scoped, tag = 'scoped memory for tpu_custom_call.1']
    #allocation5 [shape = 'u8[32768]{0}', space=vmem, size = 0x8000, scoped, tag = 'input window, operand 5, single buffered']
    #allocation6 [shape = 's32[1]{0}', space=sflag, size = 0x4, scoped, tag = 'scoped memory for tpu_custom_call.1']
    #allocation7 [shape = 'u8[16384]{0}', space=vmem, size = 0x4000, scoped, tag = 'output window, operand 0']
    %13 = vsyncpa [#allocation3], 0
    %14 = vsyncpa [#allocation6], 0
    %15 = vsyncpa [#allocation4], 0
    %s16 = scalar_lea.sflag [#allocation4], 1
    %17 = vsyncpa %s16, 0
    loop: start=0, step=1, limit=4
    $region2: #{tpu_custom_call.1} parent=1 // loop_pre_header
      _
    $region3: #{tpu_custom_call.1} parent=1 // loop_header
      %s19 = sphi 0, %s23
      %p20 = scmp.ge.s32.totalorder %s19, 4
      %s29 = sphi 0, %s31
      %s32 = sphi 0, %s29
      %s33 = sphi 0, %s32
      %s49 = sphi 0, %s33
      %s53 = sphi 0, %s53
      %s55 = sphi 0, %s53
      %s56 = sphi 0, %s55
      %s70 = sphi 0, %s56
      %s74 = sphi 0, %s74
      %s76 = sphi 0, %s74
      %s77 = sphi 0, %s76
      %s91 = sphi 0, %s77
      %s95 = sphi 0, %s95
      %s97 = sphi 0, %s95
      %s98 = sphi 0, %s97
      %s112 = sphi 0, %s98
      %s116 = sphi 0, %s116
      %s118 = sphi 0, %s116
      %s119 = sphi 0, %s118
      %s133 = sphi 0, %s119
      %s137 = sphi 0, %s137
      %s139 = sphi 0, %s137
      %s140 = sphi 0, %s139
      %s154 = sphi 0, %s140
      %s158 = sphi 0, %s158
      %s160 = sphi 0, %s158
      %s161 = sphi 0, %s160
      %s175 = sphi 0, %s161
      %s179 = sphi 0, %s179
      %s181 = sphi 0, %s179
      %s182 = sphi 0, %s181
      %s196 = sphi 0, %s182
      %s202 = sphi 0, %s204
      %s205 = sphi 0, %s202
      %s206 = sphi 0, %s205
      %s222 = sphi 0, %s206
    $region4: #{tpu_custom_call.1} parent=1 // loop_header_branch
      %22 = sbr.rel (%p20) target = $region8
    $region5: #{tpu_custom_call.1} parent=1 // loop_body
      %s24 = ssub.s32 %s19, 1
      %s25 = ssub.s32 %s19, 2
      %s26 = sadd.s32 %s19, 1
      %s27 = ssub.s32 %s19, %s26
      %p28 = scmp.eq.s32.totalorder %s27, 0
      %s30 = sadd.s32 %s29, 1
      %s31 = scalar_select %p28, %s29, %s30
      %p34 = pneg %p28
      %p35 = scmp.eq.s32.totalorder %s19, 1
      %p36 = por %p34, %p35
      %p37 = scmp.ne.s32.totalorder %s29, %s32
      %p38 = scmp.eq.s32.totalorder %s19, 0
      %p39 = por %p37, %p38
      %p40 = scmp.ne.s32.totalorder %s29, %s32
      %p41 = scmp.eq.s32.totalorder %s24, 1
      %p42 = por %p40, %p41
      %p43 = scmp.ne.s32.totalorder %s32, %s33
      %p44 = scmp.eq.s32.totalorder %s24, 0
      %p45 = por %p43, %p44
      %p46 = scmp.ne.s32.totalorder %s32, %s33
      %p47 = scmp.eq.s32.totalorder %s25, 1
      %p48 = por %p46, %p47
      %p50 = scmp.ne.s32.totalorder %s33, %s49
      %p51 = scmp.eq.s32.totalorder %s25, 0
      %p52 = por %p50, %p51
      %s54 = sadd.s32 %s53, 1
      %p57 = scmp.eq.s32.totalorder %s19, 1
      %p58 = scmp.ne.s32.totalorder %s53, %s55
      %p59 = scmp.eq.s32.totalorder %s19, 0
      %p60 = por %p58, %p59
      %p61 = scmp.ne.s32.totalorder %s53, %s55
      %p62 = scmp.eq.s32.totalorder %s24, 1
      %p63 = por %p61, %p62
      %p64 = scmp.ne.s32.totalorder %s55, %s56
      %p65 = scmp.eq.s32.totalorder %s24, 0
      %p66 = por %p64, %p65
      %p67 = scmp.ne.s32.totalorder %s55, %s56
      %p68 = scmp.eq.s32.totalorder %s25, 1
      %p69 = por %p67, %p68
      %p71 = scmp.ne.s32.totalorder %s56, %s70
      %p72 = scmp.eq.s32.totalorder %s25, 0
      %p73 = por %p71, %p72
      %s75 = sadd.s32 %s74, 1
      %p78 = scmp.eq.s32.totalorder %s19, 1
      %p79 = scmp.ne.s32.totalorder %s74, %s76
      %p80 = scmp.eq.s32.totalorder %s19, 0
      %p81 = por %p79, %p80
      %p82 = scmp.ne.s32.totalorder %s74, %s76
      %p83 = scmp.eq.s32.totalorder %s24, 1
      %p84 = por %p82, %p83
      %p85 = scmp.ne.s32.totalorder %s76, %s77
      %p86 = scmp.eq.s32.totalorder %s24, 0
      %p87 = por %p85, %p86
      %p88 = scmp.ne.s32.totalorder %s76, %s77
      %p89 = scmp.eq.s32.totalorder %s25, 1
      %p90 = por %p88, %p89
      %p92 = scmp.ne.s32.totalorder %s77, %s91
      %p93 = scmp.eq.s32.totalorder %s25, 0
      %p94 = por %p92, %p93
      %s96 = sadd.s32 %s95, 1
      %p99 = scmp.eq.s32.totalorder %s19, 1
      %p100 = scmp.ne.s32.totalorder %s95, %s97
      %p101 = scmp.eq.s32.totalorder %s19, 0
      %p102 = por %p100, %p101
      %p103 = scmp.ne.s32.totalorder %s95, %s97
      %p104 = scmp.eq.s32.totalorder %s24, 1
      %p105 = por %p103, %p104
      %p106 = scmp.ne.s32.totalorder %s97, %s98
      %p107 = scmp.eq.s32.totalorder %s24, 0
      %p108 = por %p106, %p107
      %p109 = scmp.ne.s32.totalorder %s97, %s98
      %p110 = scmp.eq.s32.totalorder %s25, 1
      %p111 = por %p109, %p110
      %p113 = scmp.ne.s32.totalorder %s98, %s112
      %p114 = scmp.eq.s32.totalorder %s25, 0
      %p115 = por %p113, %p114
      %s117 = sadd.s32 %s116, 1
      %p120 = scmp.eq.s32.totalorder %s19, 1
      %p121 = scmp.ne.s32.totalorder %s116, %s118
      %p122 = scmp.eq.s32.totalorder %s19, 0
      %p123 = por %p121, %p122
      %p124 = scmp.ne.s32.totalorder %s116, %s118
      %p125 = scmp.eq.s32.totalorder %s24, 1
      %p126 = por %p124, %p125
      %p127 = scmp.ne.s32.totalorder %s118, %s119
      %p128 = scmp.eq.s32.totalorder %s24, 0
      %p129 = por %p127, %p128
      %p130 = scmp.ne.s32.totalorder %s118, %s119
      %p131 = scmp.eq.s32.totalorder %s25, 1
      %p132 = por %p130, %p131
      %p134 = scmp.ne.s32.totalorder %s119, %s133
      %p135 = scmp.eq.s32.totalorder %s25, 0
      %p136 = por %p134, %p135
      %s138 = sadd.s32 %s137, 1
      %p141 = scmp.eq.s32.totalorder %s19, 1
      %p142 = scmp.ne.s32.totalorder %s137, %s139
      %p143 = scmp.eq.s32.totalorder %s19, 0
      %p144 = por %p142, %p143
      %p145 = scmp.ne.s32.totalorder %s137, %s139
      %p146 = scmp.eq.s32.totalorder %s24, 1
      %p147 = por %p145, %p146
      %p148 = scmp.ne.s32.totalorder %s139, %s140
      %p149 = scmp.eq.s32.totalorder %s24, 0
      %p150 = por %p148, %p149
      %p151 = scmp.ne.s32.totalorder %s139, %s140
      %p152 = scmp.eq.s32.totalorder %s25, 1
      %p153 = por %p151, %p152
      %p155 = scmp.ne.s32.totalorder %s140, %s154
      %p156 = scmp.eq.s32.totalorder %s25, 0
      %p157 = por %p155, %p156
      %s159 = sadd.s32 %s158, 1
      %p162 = scmp.eq.s32.totalorder %s19, 1
      %p163 = scmp.ne.s32.totalorder %s158, %s160
      %p164 = scmp.eq.s32.totalorder %s19, 0
      %p165 = por %p163, %p164
      %p166 = scmp.ne.s32.totalorder %s158, %s160
      %p167 = scmp.eq.s32.totalorder %s24, 1
      %p168 = por %p166, %p167
      %p169 = scmp.ne.s32.totalorder %s160, %s161
      %p170 = scmp.eq.s32.totalorder %s24, 0
      %p171 = por %p169, %p170
      %p172 = scmp.ne.s32.totalorder %s160, %s161
      %p173 = scmp.eq.s32.totalorder %s25, 1
      %p174 = por %p172, %p173
      %p176 = scmp.ne.s32.totalorder %s161, %s175
      %p177 = scmp.eq.s32.totalorder %s25, 0
      %p178 = por %p176, %p177
      %s180 = sadd.s32 %s179, 1
      %p183 = scmp.eq.s32.totalorder %s19, 1
      %p184 = scmp.ne.s32.totalorder %s179, %s181
      %p185 = scmp.eq.s32.totalorder %s19, 0
      %p186 = por %p184, %p185
      %p187 = scmp.ne.s32.totalorder %s179, %s181
      %p188 = scmp.eq.s32.totalorder %s24, 1
      %p189 = por %p187, %p188
      %p190 = scmp.ne.s32.totalorder %s181, %s182
      %p191 = scmp.eq.s32.totalorder %s24, 0
      %p192 = por %p190, %p191
      %p193 = scmp.ne.s32.totalorder %s181, %s182
      %p194 = scmp.eq.s32.totalorder %s25, 1
      %p195 = por %p193, %p194
      %p197 = scmp.ne.s32.totalorder %s182, %s196
      %p198 = scmp.eq.s32.totalorder %s25, 0
      %p199 = por %p197, %p198
      %s200 = ssub.s32 %s19, %s26
      %p201 = scmp.eq.s32.totalorder %s200, 0
      %s203 = sadd.s32 %s202, 1
      %s204 = scalar_select %p201, %s202, %s203
      %p207 = pneg %p201
      %p208 = scmp.eq.s32.totalorder %s19, 1
      %p209 = por %p207, %p208
      %p210 = scmp.ne.s32.totalorder %s202, %s205
      %p211 = scmp.eq.s32.totalorder %s19, 0
      %p212 = por %p210, %p211
      %p213 = scmp.ne.s32.totalorder %s202, %s205
      %p214 = scmp.eq.s32.totalorder %s24, 1
      %p215 = por %p213, %p214
      %p216 = scmp.ne.s32.totalorder %s205, %s206
      %p217 = scmp.eq.s32.totalorder %s24, 0
      %p218 = por %p216, %p217
      %p219 = scmp.ne.s32.totalorder %s205, %s206
      %p220 = scmp.eq.s32.totalorder %s25, 1
      %p221 = por %p219, %p220
      %p223 = scmp.ne.s32.totalorder %s206, %s222
      %p224 = scmp.eq.s32.totalorder %s25, 0
      %p225 = por %p223, %p224
      %p226 = scmp.le.s32.totalorder 1, %s19
      %p227 = scmp.lt.s32.totalorder %s19, 3
      %p228 = pnand %p226, %p227
      %p229 = pneg %p228
      // Predicated region
      $region9: #{tpu_custom_call.1} parent=5 // pred_check
        _
      $region10: #{tpu_custom_call.1} parent=5 // pred_check_branch
        %231 = sbr.rel (%p228) target = $region12
      $region11: #{tpu_custom_call.1} parent=5 // pred_region
        %s232 = ssub.s32 %s19, 1
        // Predicated region
        $region13: #{tpu_custom_call.1} parent=11 // pred_check
          %p233 = pneg %p66
        $region14: #{tpu_custom_call.1} parent=11 // pred_check_branch
          %235 = sbr.rel (%p233) target = $region16
        $region15: #{tpu_custom_call.1} parent=11 // pred_region
          _
        $region16: #{tpu_custom_call.1} parent=11 // pred_fallthru
          _
        // Predicated region
        $region17: #{tpu_custom_call.1} parent=11 // pred_check
          %p236 = pneg %p87
        $region18: #{tpu_custom_call.1} parent=11 // pred_check_branch
          %238 = sbr.rel (%p236) target = $region20
        $region19: #{tpu_custom_call.1} parent=11 // pred_region
          _
        $region20: #{tpu_custom_call.1} parent=11 // pred_fallthru
          _
        // Predicated region
        $region21: #{tpu_custom_call.1} parent=11 // pred_check
          %p239 = pneg %p108
        $region22: #{tpu_custom_call.1} parent=11 // pred_check_branch
          %241 = sbr.rel (%p239) target = $region24
        $region23: #{tpu_custom_call.1} parent=11 // pred_region
          _
        $region24: #{tpu_custom_call.1} parent=11 // pred_fallthru
          _
        // Predicated region
        $region25: #{tpu_custom_call.1} parent=11 // pred_check
          %p242 = pneg %p129
        $region26: #{tpu_custom_call.1} parent=11 // pred_check_branch
          %244 = sbr.rel (%p242) target = $region28
        $region27: #{tpu_custom_call.1} parent=11 // pred_region
          %s246 = ssub.s32 1024, 1024
          %247 = vsyncadd [#allocation3], %s246
          %s248 = sshll.u32 [#allocation2], 4
          %s249 = int_to_ptr.vmem [resolvable:$true] %s248
          %254 = dma.hbm_to_vmem [thread:$0]  %s4, 1024, %s249, [#allocation3], 256, 256, 16
        $region28: #{tpu_custom_call.1} parent=11 // pred_fallthru
          _
        // Predicated region
        $region29: #{tpu_custom_call.1} parent=11 // pred_check
          %p255 = pneg %p150
        $region30: #{tpu_custom_call.1} parent=11 // pred_check_branch
          %257 = sbr.rel (%p255) target = $region32
        $region31: #{tpu_custom_call.1} parent=11 // pred_region
          %s259 = ssub.s32 1024, 1024
          %260 = vsyncadd [#allocation6], %s259
          %s261 = sshll.u32 [#allocation5], 4
          %s262 = int_to_ptr.vmem [resolvable:$true] %s261
          %267 = dma.hbm_to_vmem [thread:$0]  %s5, 1024, %s262, [#allocation6], 256, 256, 16
        $region32: #{tpu_custom_call.1} parent=11 // pred_fallthru
          _
        // Predicated region
        $region33: #{tpu_custom_call.1} parent=11 // pred_check
          %p268 = pneg %p171
        $region34: #{tpu_custom_call.1} parent=11 // pred_check_branch
          %270 = sbr.rel (%p268) target = $region36
        $region35: #{tpu_custom_call.1} parent=11 // pred_region
          _
        $region36: #{tpu_custom_call.1} parent=11 // pred_fallthru
          _
        // Predicated region
        $region37: #{tpu_custom_call.1} parent=11 // pred_check
          %p271 = pneg %p192
        $region38: #{tpu_custom_call.1} parent=11 // pred_check_branch
          %273 = sbr.rel (%p271) target = $region40
        $region39: #{tpu_custom_call.1} parent=11 // pred_region
          _
        $region40: #{tpu_custom_call.1} parent=11 // pred_fallthru
          _
      $region12: #{tpu_custom_call.1} parent=5 // pred_fallthru
        _
      %p274 = scmp.lt.s32.totalorder %s19, 2
      // Predicated region
      $region41: #{tpu_custom_call.1} parent=5 // pred_check
        %p275 = pneg %p274
      $region42: #{tpu_custom_call.1} parent=5 // pred_check_branch
        %277 = sbr.rel (%p275) target = $region44
      $region43: #{tpu_custom_call.1} parent=5 // pred_region
        // Predicated region
        $region45: #{tpu_custom_call.1} parent=43 // pred_check
          %p278 = pneg %p39
        $region46: #{tpu_custom_call.1} parent=43 // pred_check_branch
          %280 = sbr.rel (%p278) target = $region48
        $region47: #{tpu_custom_call.1} parent=43 // pred_region
          %p281 = scmp.lt.s32.totalorder %s19, 1
          %s282 = scalar_select %p281, %s19, 1
          %s283 = smul.addr %s282, 2
          %s284 = smul.addr %s283, 4
          %s285 = scalar_lea.vmem %s0, %s284
        $region48: #{tpu_custom_call.1} parent=43 // pred_fallthru
          _
      $region44: #{tpu_custom_call.1} parent=5 // pred_fallthru
        _
      %p286 = scmp.le.s32.totalorder 1, %s19
      %p287 = scmp.lt.s32.totalorder %s19, 3
      %p288 = pnand %p286, %p287
      %p289 = pneg %p288
      // Predicated region
      $region49: #{tpu_custom_call.1} parent=5 // pred_check
        _
      $region50: #{tpu_custom_call.1} parent=5 // pred_check_branch
        %291 = sbr.rel (%p288) target = $region52
      $region51: #{tpu_custom_call.1} parent=5 // pred_region
        %s292 = ssub.s32 %s19, 1
        // Predicated region
        $region53: #{tpu_custom_call.1} parent=51 // pred_check
          %p293 = pneg %p129
        $region54: #{tpu_custom_call.1} parent=51 // pred_check_branch
          %295 = sbr.rel (%p293) target = $region56
        $region55: #{tpu_custom_call.1} parent=51 // pred_region
          %296 = dma.done [#allocation3], 1024
        $region56: #{tpu_custom_call.1} parent=51 // pred_fallthru
          _
        // Predicated region
        $region57: #{tpu_custom_call.1} parent=51 // pred_check
          %p297 = pneg %p150
        $region58: #{tpu_custom_call.1} parent=51 // pred_check_branch
          %299 = sbr.rel (%p297) target = $region60
        $region59: #{tpu_custom_call.1} parent=51 // pred_region
          %300 = dma.done [#allocation6], 1024
        $region60: #{tpu_custom_call.1} parent=51 // pred_fallthru
          _
        %p301 = scmp.lt.s32.totalorder %s24, 1
        %s302 = scalar_select %p301, %s24, 1
        %s303 = smul.addr %s302, 2
        %s304 = smul.addr %s303, 4
        %s305 = scalar_lea.vmem %s0, %s304
        %p306 = pneg %p45
        %p307 = pneg %p42
        %p308 = pneg %p66
        %p309 = pneg %p63
        %p310 = pneg %p87
        %p311 = pneg %p84
        %p312 = pneg %p108
        %p313 = pneg %p105
        %p314 = pneg %p129
        %p315 = pneg %p126
        %p316 = pneg %p150
        %p317 = pneg %p147
        %p318 = pneg %p171
        %p319 = pneg %p168
        %p320 = pneg %p192
        %p321 = pneg %p189
        %p322 = pneg %p218
        %p323 = pneg %p215
        %s324 = sand.u32 %s205, 1
        %s325 = scalar_lea.sflag [#allocation4], %s324
        %s326 = sand.u32 %s205, 1
        %s327 = smul.addr %s326, 16
        %s328 = scalar_lea.vmem [#allocation7], %s327
        %p329 = scmp.lt.s32.totalorder %s24, 1
        %s330 = scalar_select %p329, %s24, 1
        %s331 = smul.addr %s330, 2
        %s332 = smul.addr %s331, 4
        %s333 = scalar_lea.vmem %s0, %s332
        %v334 = vld [vmem:[%s333] sm:$0xff]
        %v335 = vld [vmem:[%s1] sm:$0xff]
        %v336 = vld [vmem:[%s1 + $0x8] sm:$0xff]
        %v337 = vld [vmem:[%s1 + $0x10] sm:$0xff]
        %v338 = vld [vmem:[%s1 + $0x18] sm:$0xff]
        %v339 = vld [vmem:[%s2] sm:$0xff]
        %v340 = vld [vmem:[%s2 + $0x8] sm:$0xff]
        %v341 = vld [vmem:[%s2 + $0x10] sm:$0xff]
        %v342 = vld [vmem:[%s2 + $0x18] sm:$0xff]
        %344 = vset.pattern.permute.xlu0 0
        %345 = vperm.xlu0 %344, %v339
        %v346 = vpop.permute.xlu0 %345
        %349 = vset.pattern.permute.xlu0 0
        %350 = vperm.xlu0 %349, %v340
        %v351 = vpop.permute.xlu0 %350
        %354 = vset.pattern.permute.xlu0 0
        %355 = vperm.xlu0 %354, %v341
        %v356 = vpop.permute.xlu0 %355
        %359 = vset.pattern.permute.xlu0 0
        %360 = vperm.xlu0 %359, %v342
        %v361 = vpop.permute.xlu0 %360
        %v364 = vcombine.high %v334, %v334
        %vm365 = vcmask 31744
        %v367 = vsel %vm365, %v335, 0
        %v370 = vsel %vm365, %v336, 0
        %v373 = vsel %vm365, %v337, 0
        %v376 = vsel %vm365, %v338, 0
        %vm378 = vcmask 1043456
        %v379 = vsel %vm378, %v334, 0
        %v381 = vsel %vm378, %v364, 0
        %383 = vmatprep.subr.mxu0 %v381
        %384 = vmatpush1.msra.mxu0 %v379
        %385 = vmatprep.subr.mxu0 0.0
        %386 = vmatpush1.msra.mxu0 0.0
        %387 = vmatprep.subr.mxu0 0.0
        %388 = vmatpush1.msra.mxu0 0.0
        %389 = vmatprep.subr.mxu0 0.0
        %390 = vmatpush1.msra.mxu0 0.0
        %391 = vmatprep.subr.mxu0 0.0
        %392 = vmatpush1.msra.mxu0 0.0
        %393 = vmatprep.subr.mxu0 0.0
        %394 = vmatpush1.msra.mxu0 0.0
        %395 = vmatprep.subr.mxu0 0.0
        %396 = vmatpush1.msra.mxu0 0.0
        %397 = vmatprep.subr.mxu0 0.0
        %398 = vmatpush1.msra.mxu0 0.0
        %399 = vmatprep.subr.mxu0 0.0
        %400 = vmatpush1.msra.mxu0 0.0
        %401 = vmatprep.subr.mxu0 0.0
        %402 = vmatpush1.msra.mxu0 0.0
        %403 = vmatprep.subr.mxu0 0.0
        %404 = vmatpush1.msra.mxu0 0.0
        %405 = vmatprep.subr.mxu0 0.0
        %406 = vmatpush1.msra.mxu0 0.0
        %407 = vmatprep.subr.mxu0 0.0
        %408 = vmatpush1.msra.mxu0 0.0
        %409 = vmatprep.subr.mxu0 0.0
        %410 = vmatpush1.msra.mxu0 0.0
        %411 = vmatprep.subr.mxu0 0.0
        %412 = vmatpush1.msra.mxu0 0.0
        %413 = vmatprep.subr.mxu0 0.0
        %414 = vmatpush1.msra.mxu0 0.0
        %415 = vmatprep.subr.mxu0 0.0
        %416 = vmatpush1.msra.mxu0 0.0
        %417 = vmatprep.subr.mxu0 0.0
        %418 = vmatpush1.msra.mxu0 0.0
        %419 = vmatprep.subr.mxu0 0.0
        %420 = vmatpush1.msra.mxu0 0.0
        %421 = vmatprep.subr.mxu0 0.0
        %422 = vmatpush1.msra.mxu0 0.0
        %423 = vmatprep.subr.mxu0 0.0
        %424 = vmatpush1.msra.mxu0 0.0
        %425 = vmatprep.subr.mxu0 0.0
        %426 = vmatpush1.msra.mxu0 0.0
        %427 = vmatprep.subr.mxu0 0.0
        %428 = vmatpush1.msra.mxu0 0.0
        %429 = vmatprep.subr.mxu0 0.0
        %430 = vmatpush1.msra.mxu0 0.0
        %431 = vmatprep.subr.mxu0 0.0
        %432 = vmatpush1.msra.mxu0 0.0
        %433 = vmatprep.subr.mxu0 0.0
        %434 = vmatpush1.msra.mxu0 0.0
        %435 = vmatprep.subr.mxu0 0.0
        %436 = vmatpush1.msra.mxu0 0.0
        %437 = vmatprep.subr.mxu0 0.0
        %438 = vmatpush1.msra.mxu0 0.0
        %439 = vmatprep.subr.mxu0 0.0
        %440 = vmatpush1.msra.mxu0 0.0
        %441 = vmatprep.subr.mxu0 0.0
        %442 = vmatpush1.msra.mxu0 0.0
        %443 = vmatprep.subr.mxu0 0.0
        %444 = vmatpush1.msra.mxu0 0.0
        %445 = vmatprep.subr.mxu0 0.0
        %446 = vmatpush1.msra.mxu0 0.0
        %447 = vmatprep.mubr.f32.mxu0 0.0
        %448 = vmatmul.mubr.f32.gmra.mrb[0].mxu0 %v367
        %v449 = vpop.f32.mrb[0].mxu0
        %v450 = vadd.f32 %v346, %v449
        %v451 = vpop.f32.mrb[0].mxu0
        %v452 = vadd.f32 %v346, %v451
        %453 = vmatprep.mubr.f32.mxu0 0.0
        %454 = vmatmul.mubr.f32.gmra.mrb[0].mxu0 %v370
        %v455 = vpop.f32.mrb[0].mxu0
        %v456 = vadd.f32 %v351, %v455
        %v457 = vpop.f32.mrb[0].mxu0
        %v458 = vadd.f32 %v351, %v457
        %459 = vmatprep.mubr.f32.mxu0 0.0
        %460 = vmatmul.mubr.f32.gmra.mrb[0].mxu0 %v373
        %v461 = vpop.f32.mrb[0].mxu0
        %v462 = vadd.f32 %v356, %v461
        %v463 = vpop.f32.mrb[0].mxu0
        %v464 = vadd.f32 %v356, %v463
        %465 = vmatprep.mubr.f32.mxu0 0.0
        %466 = vmatmul.mubr.f32.gmra.mrb[0].mxu0 %v376
        %v467 = vpop.f32.mrb[0].mxu0
        %v468 = vadd.f32 %v361, %v467
        %v469 = vpop.f32.mrb[0].mxu0
        %v470 = vadd.f32 %v361, %v469
        %471 = vdwg.mxu0
        %v472 = vmul.f32 %v450, 0.5
        %v473 = vmul.f32 %v452, 0.5
        %v474 = vmul.f32 %v456, 0.5
        %v475 = vmul.f32 %v458, 0.5
        %v476 = vmul.f32 %v462, 0.5
        %v477 = vmul.f32 %v464, 0.5
        %v478 = vmul.f32 %v468, 0.5
        %v479 = vmul.f32 %v470, 0.5
        %v480 = vmul.f32 %v450, 0.70710677
        %v481 = vmul.f32 %v452, 0.70710677
        %v482 = vmul.f32 %v456, 0.70710677
        %v483 = vmul.f32 %v458, 0.70710677
        %v484 = vmul.f32 %v462, 0.70710677
        %v485 = vmul.f32 %v464, 0.70710677
        %v486 = vmul.f32 %v468, 0.70710677
        %v487 = vmul.f32 %v470, 0.70710677
        %vm488 = vcmp.ge.f32.partialorder %v480, 0.0
        %vm489 = vcmp.ge.f32.partialorder %v481, 0.0
        %vm490 = vcmp.ge.f32.partialorder %v482, 0.0
        %vm491 = vcmp.ge.f32.partialorder %v483, 0.0
        %vm492 = vcmp.ge.f32.partialorder %v484, 0.0
        %vm493 = vcmp.ge.f32.partialorder %v485, 0.0
        %vm494 = vcmp.ge.f32.partialorder %v486, 0.0
        %vm495 = vcmp.ge.f32.partialorder %v487, 0.0
        %v496 = vsel %vm488, 1.0, -1.0
        %v497 = vsel %vm489, 1.0, -1.0
        %v498 = vsel %vm490, 1.0, -1.0
        %v499 = vsel %vm491, 1.0, -1.0
        %v500 = vsel %vm492, 1.0, -1.0
        %v501 = vsel %vm493, 1.0, -1.0
        %v502 = vsel %vm494, 1.0, -1.0
        %v503 = vsel %vm495, 1.0, -1.0
        %v504 = vand.u32 2147483647, %v480
        %v505 = vand.u32 2147483647, %v481
        %v506 = vand.u32 2147483647, %v482
        %v507 = vand.u32 2147483647, %v483
        %v508 = vand.u32 2147483647, %v484
        %v509 = vand.u32 2147483647, %v485
        %v510 = vand.u32 2147483647, %v486
        %v511 = vand.u32 2147483647, %v487
        %v512 = vmul.f32 %v504, 0.3275911
        %v513 = vmul.f32 %v505, 0.3275911
        %v514 = vmul.f32 %v506, 0.3275911
        %v515 = vmul.f32 %v507, 0.3275911
        %v516 = vmul.f32 %v508, 0.3275911
        %v517 = vmul.f32 %v509, 0.3275911
        %v518 = vmul.f32 %v510, 0.3275911
        %v519 = vmul.f32 %v511, 0.3275911
        %v520 = vadd.f32 %v512, 1.0
        %v521 = vadd.f32 %v513, 1.0
        %v522 = vadd.f32 %v514, 1.0
        %v523 = vadd.f32 %v515, 1.0
        %v524 = vadd.f32 %v516, 1.0
        %v525 = vadd.f32 %v517, 1.0
        %v526 = vadd.f32 %v518, 1.0
        %v527 = vadd.f32 %v519, 1.0
        %v528 = vrcp.pop %v520
        %v529 = vrcp.pop %v521
        %v530 = vrcp.pop %v522
        %v531 = vrcp.pop %v523
        %v532 = vrcp.pop %v524
        %v533 = vrcp.pop %v525
        %v534 = vrcp.pop %v526
        %v535 = vrcp.pop %v527
        %v536 = vmul.f32 %v528, 1.0614054
        %v537 = vmul.f32 %v529, 1.0614054
        %v538 = vmul.f32 %v530, 1.0614054
        %v539 = vmul.f32 %v531, 1.0614054
        %v540 = vmul.f32 %v532, 1.0614054
        %v541 = vmul.f32 %v533, 1.0614054
        %v542 = vmul.f32 %v534, 1.0614054
        %v543 = vmul.f32 %v535, 1.0614054
        %v544 = vadd.f32 %v536, -1.4531521
        %v545 = vadd.f32 %v537, -1.4531521
        %v546 = vadd.f32 %v538, -1.4531521
        %v547 = vadd.f32 %v539, -1.4531521
        %v548 = vadd.f32 %v540, -1.4531521
        %v549 = vadd.f32 %v541, -1.4531521
        %v550 = vadd.f32 %v542, -1.4531521
        %v551 = vadd.f32 %v543, -1.4531521
        %v552 = vmul.f32 %v544, %v528
        %v553 = vmul.f32 %v545, %v529
        %v554 = vmul.f32 %v546, %v530
        %v555 = vmul.f32 %v547, %v531
        %v556 = vmul.f32 %v548, %v532
        %v557 = vmul.f32 %v549, %v533
        %v558 = vmul.f32 %v550, %v534
        %v559 = vmul.f32 %v551, %v535
        %v560 = vadd.f32 %v552, 1.4214138
        %v561 = vadd.f32 %v553, 1.4214138
        %v562 = vadd.f32 %v554, 1.4214138
        %v563 = vadd.f32 %v555, 1.4214138
        %v564 = vadd.f32 %v556, 1.4214138
        %v565 = vadd.f32 %v557, 1.4214138
        %v566 = vadd.f32 %v558, 1.4214138
        %v567 = vadd.f32 %v559, 1.4214138
        %v568 = vmul.f32 %v560, %v528
        %v569 = vmul.f32 %v561, %v529
        %v570 = vmul.f32 %v562, %v530
        %v571 = vmul.f32 %v563, %v531
        %v572 = vmul.f32 %v564, %v532
        %v573 = vmul.f32 %v565, %v533
        %v574 = vmul.f32 %v566, %v534
        %v575 = vmul.f32 %v567, %v535
        %v576 = vadd.f32 %v568, -0.28449672
        %v577 = vadd.f32 %v569, -0.28449672
        %v578 = vadd.f32 %v570, -0.28449672
        %v579 = vadd.f32 %v571, -0.28449672
        %v580 = vadd.f32 %v572, -0.28449672
        %v581 = vadd.f32 %v573, -0.28449672
        %v582 = vadd.f32 %v574, -0.28449672
        %v583 = vadd.f32 %v575, -0.28449672
        %v584 = vmul.f32 %v576, %v528
        %v585 = vmul.f32 %v577, %v529
        %v586 = vmul.f32 %v578, %v530
        %v587 = vmul.f32 %v579, %v531
        %v588 = vmul.f32 %v580, %v532
        %v589 = vmul.f32 %v581, %v533
        %v590 = vmul.f32 %v582, %v534
        %v591 = vmul.f32 %v583, %v535
        %v592 = vadd.f32 %v584, 0.2548296
        %v593 = vadd.f32 %v585, 0.2548296
        %v594 = vadd.f32 %v586, 0.2548296
        %v595 = vadd.f32 %v587, 0.2548296
        %v596 = vadd.f32 %v588, 0.2548296
        %v597 = vadd.f32 %v589, 0.2548296
        %v598 = vadd.f32 %v590, 0.2548296
        %v599 = vadd.f32 %v591, 0.2548296
        %v600 = vmul.f32 %v592, %v528
        %v601 = vmul.f32 %v593, %v529
        %v602 = vmul.f32 %v594, %v530
        %v603 = vmul.f32 %v595, %v531
        %v604 = vmul.f32 %v596, %v532
        %v605 = vmul.f32 %v597, %v533
        %v606 = vmul.f32 %v598, %v534
        %v607 = vmul.f32 %v599, %v535
        %v608 = vsub.f32 0.0, %v504
        %v609 = vsub.f32 0.0, %v505
        %v610 = vsub.f32 0.0, %v506
        %v611 = vsub.f32 0.0, %v507
        %v612 = vsub.f32 0.0, %v508
        %v613 = vsub.f32 0.0, %v509
        %v614 = vsub.f32 0.0, %v510
        %v615 = vsub.f32 0.0, %v511
        %v616 = vmul.f32 %v608, %v504
        %v617 = vmul.f32 %v609, %v505
        %v618 = vmul.f32 %v610, %v506
        %v619 = vmul.f32 %v611, %v507
        %v620 = vmul.f32 %v612, %v508
        %v621 = vmul.f32 %v613, %v509
        %v622 = vmul.f32 %v614, %v510
        %v623 = vmul.f32 %v615, %v511
        %v624 = vmul.f32 %v616, 1.442695
        %v625 = vpow.pop %v624
        %v626 = vmul.f32 %v617, 1.442695
        %v627 = vpow.pop %v626
        %v628 = vmul.f32 %v618, 1.442695
        %v629 = vpow.pop %v628
        %v630 = vmul.f32 %v619, 1.442695
        %v631 = vpow.pop %v630
        %v632 = vmul.f32 %v620, 1.442695
        %v633 = vpow.pop %v632
        %v634 = vmul.f32 %v621, 1.442695
        %v635 = vpow.pop %v634
        %v636 = vmul.f32 %v622, 1.442695
        %v637 = vpow.pop %v636
        %v638 = vmul.f32 %v623, 1.442695
        %v639 = vpow.pop %v638
        %v640 = vmul.f32 %v600, %v625
        %v641 = vmul.f32 %v601, %v627
        %v642 = vmul.f32 %v602, %v629
        %v643 = vmul.f32 %v603, %v631
        %v644 = vmul.f32 %v604, %v633
        %v645 = vmul.f32 %v605, %v635
        %v646 = vmul.f32 %v606, %v637
        %v647 = vmul.f32 %v607, %v639
        %v648 = vsub.f32 1.0, %v640
        %v649 = vsub.f32 1.0, %v641
        %v650 = vsub.f32 1.0, %v642
        %v651 = vsub.f32 1.0, %v643
        %v652 = vsub.f32 1.0, %v644
        %v653 = vsub.f32 1.0, %v645
        %v654 = vsub.f32 1.0, %v646
        %v655 = vsub.f32 1.0, %v647
        %v656 = vmul.f32 %v496, %v648
        %v657 = vmul.f32 %v497, %v649
        %v658 = vmul.f32 %v498, %v650
        %v659 = vmul.f32 %v499, %v651
        %v660 = vmul.f32 %v500, %v652
        %v661 = vmul.f32 %v501, %v653
        %v662 = vmul.f32 %v502, %v654
        %v663 = vmul.f32 %v503, %v655
        %v664 = vadd.f32 %v656, 1.0
        %v665 = vadd.f32 %v657, 1.0
        %v666 = vadd.f32 %v658, 1.0
        %v667 = vadd.f32 %v659, 1.0
        %v668 = vadd.f32 %v660, 1.0
        %v669 = vadd.f32 %v661, 1.0
        %v670 = vadd.f32 %v662, 1.0
        %v671 = vadd.f32 %v663, 1.0
        %v672 = vmul.f32 %v472, %v664
        %v673 = vmul.f32 %v473, %v665
        %v674 = vmul.f32 %v474, %v666
        %v675 = vmul.f32 %v475, %v667
        %v676 = vmul.f32 %v476, %v668
        %v677 = vmul.f32 %v477, %v669
        %v678 = vmul.f32 %v478, %v670
        %v679 = vmul.f32 %v479, %v671
        %v680 = vld [vmem:[%s3] sm:$0xff]
        %v681 = vld [vmem:[%s3 + $0x8] sm:$0xff]
        %v682 = vld [vmem:[%s3 + $0x10] sm:$0xff]
        %v683 = vld [vmem:[%s3 + $0x18] sm:$0xff]
        %v684 = vld [vmem:[%s3 + $0x20] sm:$0xff]
        %v685 = vld [vmem:[%s3 + $0x28] sm:$0xff]
        %v686 = vld [vmem:[%s3 + $0x30] sm:$0xff]
        %v687 = vld [vmem:[%s3 + $0x38] sm:$0xff]
        %v688 = vadd.f32 %v672, %v680
        %v689 = vadd.f32 %v673, %v681
        %v690 = vadd.f32 %v674, %v682
        %v691 = vadd.f32 %v675, %v683
        %v692 = vadd.f32 %v676, %v684
        %v693 = vadd.f32 %v677, %v685
        %v694 = vadd.f32 %v678, %v686
        %v695 = vadd.f32 %v679, %v687
        %v696 = vadd.f32 %v688, %v689
        %v697 = vadd.f32 %v696, %v690
        %v698 = vadd.f32 %v697, %v691
        %v699 = vadd.f32 %v698, %v692
        %v700 = vadd.f32 %v699, %v693
        %v701 = vadd.f32 %v700, %v694
        %v702 = vadd.f32 %v701, %v695
        %703 = vadd.xlane.f32.xlu0 %v702
        %v704 = vpop.xlane.xlu0 %703
        %v705 = vrot.slane %v704, 4
        %v706 = vadd.f32 %v704, %v705
        %v707 = vrot.slane %v706, 2
        %v708 = vadd.f32 %v706, %v707
        %v709 = vrot.slane %v708, 1
        %v710 = vadd.f32 %v708, %v709
        %s711 = vtos %v710
        %v712 = vrcp.pop 8192.0
        %s713 = vtos %v712
        %s714 = smul.f32 %s711, %s713
        %v715 = vmul.f32 %v688, %v688
        %v716 = vmul.f32 %v689, %v689
        %v717 = vmul.f32 %v690, %v690
        %v718 = vmul.f32 %v691, %v691
        %v719 = vmul.f32 %v692, %v692
        %v720 = vmul.f32 %v693, %v693
        %v721 = vmul.f32 %v694, %v694
        %v722 = vmul.f32 %v695, %v695
        %v723 = vadd.f32 %v715, %v716
        %v724 = vadd.f32 %v723, %v717
        %v725 = vadd.f32 %v724, %v718
        %v726 = vadd.f32 %v725, %v719
        %v727 = vadd.f32 %v726, %v720
        %v728 = vadd.f32 %v727, %v721
        %v729 = vadd.f32 %v728, %v722
        %730 = vadd.xlane.f32.xlu0 %v729
        %v731 = vpop.xlane.xlu0 %730
        %v732 = vrot.slane %v731, 4
        %v733 = vadd.f32 %v731, %v732
        %v734 = vrot.slane %v733, 2
        %v735 = vadd.f32 %v733, %v734
        %v736 = vrot.slane %v735, 1
        %v737 = vadd.f32 %v735, %v736
        %s738 = vtos %v737
        %v739 = vrcp.pop 8192.0
        %s740 = vtos %v739
        %s741 = smul.f32 %s738, %s740
        %s742 = smul.f32 %s714, %s714
        %s743 = ssub.f32 %s741, %s742
        %s744 = smax.f32 %s743, 0.0
        %v745 = vstv %s714
        %v746 = vsub.f32 %v688, %v745
        %v747 = vsub.f32 %v689, %v745
        %v748 = vsub.f32 %v690, %v745
        %v749 = vsub.f32 %v691, %v745
        %v750 = vsub.f32 %v692, %v745
        %v751 = vsub.f32 %v693, %v745
        %v752 = vsub.f32 %v694, %v745
        %v753 = vsub.f32 %v695, %v745
        %s754 = sadd.f32 %s744, 1e-05
        %v755 = vstv %s754
        %v756 = vrsqrt.pop %v755
        %s757 = vtos %v756
        %v758 = vstv %s757
        %v759 = vmul.f32 %v746, %v758
        %v760 = vmul.f32 %v747, %v758
        %v761 = vmul.f32 %v748, %v758
        %v762 = vmul.f32 %v749, %v758
        %v763 = vmul.f32 %v750, %v758
        %v764 = vmul.f32 %v751, %v758
        %v765 = vmul.f32 %v752, %v758
        %v766 = vmul.f32 %v753, %v758
        %v767 = vld [vmem:[#allocation2] sm:$0xff]
        %v768 = vld [vmem:[#allocation2 + $0x8] sm:$0xff]
        %v769 = vld [vmem:[#allocation2 + $0x10] sm:$0xff]
        %v770 = vld [vmem:[#allocation2 + $0x18] sm:$0xff]
        %v771 = vld [vmem:[#allocation2 + $0x20] sm:$0xff]
        %v772 = vld [vmem:[#allocation2 + $0x28] sm:$0xff]
        %v773 = vld [vmem:[#allocation2 + $0x30] sm:$0xff]
        %v774 = vld [vmem:[#allocation2 + $0x38] sm:$0xff]
        %v775 = vmul.f32 %v759, %v767
        %v776 = vmul.f32 %v760, %v768
        %v777 = vmul.f32 %v761, %v769
        %v778 = vmul.f32 %v762, %v770
        %v779 = vmul.f32 %v763, %v771
        %v780 = vmul.f32 %v764, %v772
        %v781 = vmul.f32 %v765, %v773
        %v782 = vmul.f32 %v766, %v774
        %v783 = vld [vmem:[#allocation5] sm:$0xff]
        %v784 = vld [vmem:[#allocation5 + $0x8] sm:$0xff]
        %v785 = vld [vmem:[#allocation5 + $0x10] sm:$0xff]
        %v786 = vld [vmem:[#allocation5 + $0x18] sm:$0xff]
        %v787 = vld [vmem:[#allocation5 + $0x20] sm:$0xff]
        %v788 = vld [vmem:[#allocation5 + $0x28] sm:$0xff]
        %v789 = vld [vmem:[#allocation5 + $0x30] sm:$0xff]
        %v790 = vld [vmem:[#allocation5 + $0x38] sm:$0xff]
        %v791 = vadd.f32 %v775, %v783
        %v792 = vadd.f32 %v776, %v784
        %v793 = vadd.f32 %v777, %v785
        %v794 = vadd.f32 %v778, %v786
        %v795 = vadd.f32 %v779, %v787
        %v796 = vadd.f32 %v780, %v788
        %v797 = vadd.f32 %v781, %v789
        %v798 = vadd.f32 %v782, %v790
        %v799 = vld [vmem:[%s6] sm:$0xff]
        %v800 = vld [vmem:[%s7] sm:$0xff]
        %802 = vset.pattern.permute.xlu0 0
        %803 = vperm.xlu0 %802, %v800
        %v804 = vpop.permute.xlu0 %803
        %vm806 = vcmask 261120
        %v808 = vsel %vm806, %v799, 0
        %810 = vmatprep.subr.mxu0 %v792
        %811 = vmatpush1.msra.mxu0 %v791
        %812 = vmatprep.subr.mxu0 %v794
        %813 = vmatpush1.msra.mxu0 %v793
        %814 = vmatprep.subr.mxu0 %v796
        %815 = vmatpush1.msra.mxu0 %v795
        %816 = vmatprep.subr.mxu0 %v798
        %817 = vmatpush1.msra.mxu0 %v797
        %818 = vmatprep.subr.mxu0 0.0
        %819 = vmatpush1.msra.mxu0 0.0
        %820 = vmatprep.subr.mxu0 0.0
        %821 = vmatpush1.msra.mxu0 0.0
        %822 = vmatprep.subr.mxu0 0.0
        %823 = vmatpush1.msra.mxu0 0.0
        %824 = vmatprep.subr.mxu0 0.0
        %825 = vmatpush1.msra.mxu0 0.0
        %826 = vmatprep.subr.mxu0 0.0
        %827 = vmatpush1.msra.mxu0 0.0
        %828 = vmatprep.subr.mxu0 0.0
        %829 = vmatpush1.msra.mxu0 0.0
        %830 = vmatprep.subr.mxu0 0.0
        %831 = vmatpush1.msra.mxu0 0.0
        %832 = vmatprep.subr.mxu0 0.0
        %833 = vmatpush1.msra.mxu0 0.0
        %834 = vmatprep.subr.mxu0 0.0
        %835 = vmatpush1.msra.mxu0 0.0
        %836 = vmatprep.subr.mxu0 0.0
        %837 = vmatpush1.msra.mxu0 0.0
        %838 = vmatprep.subr.mxu0 0.0
        %839 = vmatpush1.msra.mxu0 0.0
        %840 = vmatprep.subr.mxu0 0.0
        %841 = vmatpush1.msra.mxu0 0.0
        %842 = vmatprep.subr.mxu0 0.0
        %843 = vmatpush1.msra.mxu0 0.0
        %844 = vmatprep.subr.mxu0 0.0
        %845 = vmatpush1.msra.mxu0 0.0
        %846 = vmatprep.subr.mxu0 0.0
        %847 = vmatpush1.msra.mxu0 0.0
        %848 = vmatprep.subr.mxu0 0.0
        %849 = vmatpush1.msra.mxu0 0.0
        %850 = vmatprep.subr.mxu0 0.0
        %851 = vmatpush1.msra.mxu0 0.0
        %852 = vmatprep.subr.mxu0 0.0
        %853 = vmatpush1.msra.mxu0 0.0
        %854 = vmatprep.subr.mxu0 0.0
        %855 = vmatpush1.msra.mxu0 0.0
        %856 = vmatprep.subr.mxu0 0.0
        %857 = vmatpush1.msra.mxu0 0.0
        %858 = vmatprep.subr.mxu0 0.0
        %859 = vmatpush1.msra.mxu0 0.0
        %860 = vmatprep.subr.mxu0 0.0
        %861 = vmatpush1.msra.mxu0 0.0
        %862 = vmatprep.subr.mxu0 0.0
        %863 = vmatpush1.msra.mxu0 0.0
        %864 = vmatprep.subr.mxu0 0.0
        %865 = vmatpush1.msra.mxu0 0.0
        %866 = vmatprep.subr.mxu0 0.0
        %867 = vmatpush1.msra.mxu0 0.0
        %868 = vmatprep.subr.mxu0 0.0
        %869 = vmatpush1.msra.mxu0 0.0
        %870 = vmatprep.subr.mxu0 0.0
        %871 = vmatpush1.msra.mxu0 0.0
        %872 = vmatprep.subr.mxu0 0.0
        %873 = vmatpush1.msra.mxu0 0.0
        %874 = vmatprep.mubr.f32.mxu0 0.0
        %875 = vmatmul.mubr.f32.gmra.mrb[0].mxu0 %v808
        %v876 = vpop.f32.mrb[0].mxu0
        %v877 = vadd.f32 %v804, %v876
        %v878 = vpop.f32.mrb[0].mxu0
        %v879 = vadd.f32 %v804, %v878
        %880 = vdwg.mxu0
        %881 = vst [vmem:[%s328] sm:$0xff] %v877
        %882 = vst [vmem:[%s328 + $0x8] sm:$0xff] %v879
        %s883 = sand.u32 %s205, 1
        %s884 = scalar_lea.sflag [#allocation4], %s883
        %s885 = sand.u32 %s205, 1
        %s886 = smul.addr %s885, 16
        %s887 = scalar_lea.vmem [#allocation7], %s886
        // Predicated region
        $region61: #{tpu_custom_call.1} parent=51 // pred_check
          %p888 = pneg %p215
        $region62: #{tpu_custom_call.1} parent=51 // pred_check_branch
          %890 = sbr.rel (%p888) target = $region64
        $region63: #{tpu_custom_call.1} parent=51 // pred_region
          %s892 = ssub.s32 256, 256
          %893 = vsyncadd %s884, %s892
          %s894 = smul.addr %s24, 2
          %s895 = smul.addr %s894, 128
          %s896 = scalar_lea.hbm %s8, %s895
          %s898 = sshll.u32 %s887, 4
          %s899 = int_to_ptr.vmem [resolvable:$true] %s898
          %901 = dma.vmem_to_hbm [thread:$0]  %s899, 256, %s896, %s884
        $region64: #{tpu_custom_call.1} parent=51 // pred_fallthru
          _
      $region52: #{tpu_custom_call.1} parent=5 // pred_fallthru
        _
      %p902 = scmp.le.s32.totalorder 2, %s19
      // Predicated region
      $region65: #{tpu_custom_call.1} parent=5 // pred_check
        %p903 = pneg %p902
      $region66: #{tpu_custom_call.1} parent=5 // pred_check_branch
        %905 = sbr.rel (%p903) target = $region68
      $region67: #{tpu_custom_call.1} parent=5 // pred_region
        %s906 = ssub.s32 %s19, 2
        // Predicated region
        $region69: #{tpu_custom_call.1} parent=67 // pred_check
          %p907 = pneg %p221
        $region70: #{tpu_custom_call.1} parent=67 // pred_check_branch
          %909 = sbr.rel (%p907) target = $region72
        $region71: #{tpu_custom_call.1} parent=67 // pred_region
          %s910 = sand.u32 %s206, 1
          %s911 = scalar_lea.sflag [#allocation4], %s910
          %s912 = sand.u32 %s206, 1
          %s913 = smul.addr %s912, 16
          %s914 = scalar_lea.vmem [#allocation7], %s913
          %915 = dma.done %s911, 256
        $region72: #{tpu_custom_call.1} parent=67 // pred_fallthru
          _
      $region68: #{tpu_custom_call.1} parent=5 // pred_fallthru
        _
    $region6: #{tpu_custom_call.1} parent=1 // loop_footer
      %s23 = sadd.s32 1, %s19
    $region7: #{tpu_custom_call.1} parent=1 // loop_footer_branch
      %18 = sbr.rel target = $region3
    $region8: #{tpu_custom_call.1} parent=1 // loop_exit
      _
    %916 = vsyncpa [#allocation3], 1
    %s917 = scalar_lea.sflag [#allocation3], 1
    %918 = vsyncpa %s917, 1
    %919 = vsyncpa [#allocation6], 1
    %920 = vsyncpa [#allocation4], 1
    %s921 = scalar_lea.sflag [#allocation4], 1
    %922 = vsyncpa %s921, 1

</llo_original>
